<compile_context>
chip_gen: v6e
topology: v6e:2x2x1
jax: 0.10.0
libtpu: 0.0.40
codegen_flags: <defaults>
</compile_context>

<pallas_src>
import functools

import jax
import jax.numpy as jnp
from jax.experimental import pallas as pl
from jax.experimental.pallas import tpu as pltpu

_LANE = 128


def _largest_divisor_leq(n, cap):
    cap = max(1, min(n, cap))
    for d in range(cap, 0, -1):
        if n % d == 0:
            return d
    return 1


def _baseconv_kernel(xpad_ref, w_ref, shift_ref, out_ref,
                     *, tile_h, Wo, K, Cin, Cout_pad, stride):
    # xpad_ref : (1, Hp, Wp, Cin)            full padded image for batch n
    #                                         (block index constant over the row
    #                                          axis -> stays resident, no re-DMA)
    # w_ref    : (K*K*Cin, Cout_pad)         conv weight with BN scale folded in,
    #                                         (kh, kw, cin)-major, zero-padded lanes
    # shift_ref: (1, Cout_pad)               fused BN shift (beta - mean*scale)
    # out_ref  : (1, tile_h, Wo, Cout_pad)   lane-dense output row tile
    t = pl.program_id(1)
    row0 = pl.multiple_of(t * (tile_h * stride), tile_h * stride)

    # Build the im2col patch matrix: each tap is a direct Ref slice of the
    # (tile_h, Wo, Cin) sub-window; concatenate all K*K taps along the
    # contraction axis so a SINGLE matmul contracts over K*K*Cin.
    taps = []
    for kh in range(K):
        for kw in range(K):
            if stride == 1:
                win = xpad_ref[0, pl.ds(row0 + kh, tile_h), pl.ds(kw, Wo), :]
            else:
                win = xpad_ref[0,
                               pl.ds(row0 + kh, tile_h, stride),
                               pl.ds(kw, Wo, stride), :]
            taps.append(win.reshape(tile_h * Wo, Cin))
    patch = jnp.concatenate(taps, axis=-1)          # (tile_h*Wo, K*K*Cin), input dtype

    # One MXU matmul, f32 accumulate (no operand upcast).
    acc = jnp.dot(patch, w_ref[...], preferred_element_type=jnp.float32)

    # Fused BN shift (scale already folded into weights) + SiLU.
    y = acc + shift_ref[...]
    y = y * jax.nn.sigmoid(y)
    out_ref[0] = y.reshape(tile_h, Wo, Cout_pad).astype(out_ref.dtype)


def base_conv_forward(x_nchw, weight, gamma, beta, running_mean, running_var,
                      *, ksize, stride, eps=1e-5, tile_h=None):
    """Conv2d(ksize, stride, pad=(ksize-1)//2, groups=1, bias=False)
       -> BatchNorm2d (inference) -> SiLU.   Input/output are NCHW."""
    N, Cin, H, W = x_nchw.shape
    Cout = weight.shape[0]
    K = ksize
    pad = (K - 1) // 2
    Ho = (H + 2 * pad - K) // stride + 1
    Wo = (W + 2 * pad - K) // stride + 1

    # Lane-dense output channel dimension.
    Cout_pad = ((Cout + _LANE - 1) // _LANE) * _LANE

    # Row-tile selection: largest divisor of Ho keeping the f32 tile modest.
    if tile_h is None:
        cap = max(1, (2 * 1024 * 1024) // max(1, Wo * Cout_pad * 4))
        tile_h = _largest_divisor_leq(Ho, cap)
    assert Ho % tile_h == 0, (Ho, tile_h)
    n_t = Ho // tile_h

    # glue: NCHW -> NHWC, spatial zero-padding.
    x_nhwc = jnp.transpose(x_nchw, (0, 2, 3, 1))
    x_pad = jnp.pad(x_nhwc, ((0, 0), (pad, pad), (pad, pad), (0, 0)))
    Hp, Wp = H + 2 * pad, W + 2 * pad

    # Fused BN parameters; fold scale into the weight columns so the kernel
    # epilogue is only `+ shift` and SiLU.
    inv_std = 1.0 / jnp.sqrt(running_var.astype(jnp.float32) + eps)
    scale = gamma.astype(jnp.float32) * inv_std                       # (Cout,)
    shift = beta.astype(jnp.float32) - running_mean.astype(jnp.float32) * scale

    # conv weight (Cout, Cin, K, K) -> (K*K*Cin, Cout), (kh, kw, cin) major,
    # scaled, then zero-padded to Cout_pad lanes. Kept in the input dtype.
    w_mat = jnp.transpose(weight, (2, 3, 1, 0)).reshape(K * K * Cin, Cout)
    w_mat = (w_mat.astype(jnp.float32) * scale[None, :]).astype(x_nchw.dtype)
    w_mat = jnp.pad(w_mat, ((0, 0), (0, Cout_pad - Cout)))
    shift_p = jnp.pad(shift, (0, Cout_pad - Cout)).reshape(1, Cout_pad)
    shift_p = shift_p.astype(jnp.float32)

    kernel = functools.partial(
        _baseconv_kernel, tile_h=tile_h, Wo=Wo, K=K, Cin=Cin,
        Cout_pad=Cout_pad, stride=stride)

    out_nhwc = pl.pallas_call(
        kernel,
        out_shape=jax.ShapeDtypeStruct((N, Ho, Wo, Cout_pad), x_nchw.dtype),
        grid_spec=pltpu.PrefetchScalarGridSpec(
            num_scalar_prefetch=0,
            grid=(N, n_t),
            in_specs=[
                # full padded image per batch element, resident across row tiles
                pl.BlockSpec((1, Hp, Wp, Cin), lambda n, t: (n, 0, 0, 0)),
                # weights / shift resident for the whole grid
                pl.BlockSpec((K * K * Cin, Cout_pad), lambda n, t: (0, 0)),
                pl.BlockSpec((1, Cout_pad), lambda n, t: (0, 0)),
            ],
            out_specs=pl.BlockSpec((1, tile_h, Wo, Cout_pad),
                                   lambda n, t: (n, t, 0, 0)),
        ),
        compiler_params=pltpu.CompilerParams(
            dimension_semantics=("parallel", "parallel"),
            vmem_limit_bytes=48 * 1024 * 1024),
    )(x_pad, w_mat, shift_p)

    # glue: drop padded channels, NHWC -> NCHW to match PyTorch convention.
    return jnp.transpose(out_nhwc[..., :Cout], (0, 3, 1, 2))


def _reference(x_nchw, weight, gamma, beta, running_mean, running_var,
               *, ksize, stride, eps=1e-5):
    pad = (ksize - 1) // 2
    y = jax.lax.conv_general_dilated(
        x_nchw.astype(jnp.float32), weight.astype(jnp.float32),
        window_strides=(stride, stride),
        padding=[(pad, pad), (pad, pad)],
        dimension_numbers=("NCHW", "OIHW", "NCHW"))
    scale = gamma / jnp.sqrt(running_var + eps)
    shift = beta - running_mean * scale
    y = y * scale[None, :, None, None] + shift[None, :, None, None]
    return y * jax.nn.sigmoid(y)


if __name__ == "__main__":
    # Small deterministic shapes consistent with BaseConv(in=4, out=8, ksize=3, stride=1)
    N, Cin, H, W = 2, 4, 16, 16
    Cout, K, stride = 8, 3, 1

    key = jax.random.PRNGKey(0)
    kx, kw, kg, kb, km, kv = jax.random.split(key, 6)

    x = jax.random.normal(kx, (N, Cin, H, W), dtype=jnp.float32)
    weight = jax.random.normal(kw, (Cout, Cin, K, K), dtype=jnp.float32) * 0.1
    gamma = 1.0 + 0.1 * jax.random.normal(kg, (Cout,), dtype=jnp.float32)
    beta = 0.1 * jax.random.normal(kb, (Cout,), dtype=jnp.float32)
    running_mean = 0.05 * jax.random.normal(km, (Cout,), dtype=jnp.float32)
    running_var = 1.0 + 0.1 * jnp.abs(jax.random.normal(kv, (Cout,), dtype=jnp.float32))

    # tile_h=8 -> grid (N=2, Ho/tile_h=2), exercising the row-tiled path.
    out = base_conv_forward(x, weight, gamma, beta, running_mean, running_var,
                            ksize=K, stride=stride, tile_h=8)
    out = jax.block_until_ready(out)

    ref = _reference(x, weight, gamma, beta, running_mean, running_var,
                     ksize=K, stride=stride)
    assert out.shape == (N, Cout, H, W), out.shape
    assert jnp.allclose(out, ref, atol=1e-4, rtol=1e-4), float(jnp.max(jnp.abs(out - ref)))

    print("KERNEL_OK")
</pallas_src>

<mosaic_0001>
module attributes {stable_mosaic.version = 11 : i64} {
  func.func @_baseconv_kernel(%arg0: i32, %arg1: i32, %arg2: memref<1x18x18x4xf32, #tpu.memory_space<vmem>>, %arg3: memref<36x128xf32, #tpu.memory_space<vmem>>, %arg4: memref<1x128xf32, #tpu.memory_space<vmem>>, %arg5: memref<1x8x16x128xf32, #tpu.memory_space<vmem>>) attributes {dimension_semantics = [#tpu.dimension_semantics<parallel>, #tpu.dimension_semantics<parallel>], iteration_bounds = array<i64: 2, 2>, scalar_prefetch = 0 : i64, scratch_operands = 0 : i64, tpu.core_type = #tpu.core_type<tc>, window_params = [{transform_indices = @transform_0, window_bounds = array<i64: 1, 18, 18, 4>}, {pipeline_mode = #tpu.pipeline_mode<synchronous>, transform_indices = @transform_1, window_bounds = array<i64: 36, 128>}, {pipeline_mode = #tpu.pipeline_mode<synchronous>, transform_indices = @transform_2, window_bounds = array<i64: 1, 128>}, {transform_indices = @transform_3, window_bounds = array<i64: 1, 8, 16, 128>}]} {
    %c8_i32 = arith.constant 8 : i32
    %0 = arith.muli %arg1, %c8_i32 : i32
    %1 = tpu.assume_multiple %0, 8 : i32
    %c0_i32 = arith.constant 0 : i32
    %2 = arith.addi %1, %c0_i32 : i32
    %c0 = arith.constant 0 : index
    %3 = arith.index_cast %2 : i32 to index
    %c0_0 = arith.constant 0 : index
    %c0_1 = arith.constant 0 : index
    %4 = vector.load %arg2[%c0, %3, %c0_0, %c0_1] : memref<1x18x18x4xf32, #tpu.memory_space<vmem>>, vector<1x8x16x4xf32>
    %5 = vector.shape_cast %4 : vector<1x8x16x4xf32> to vector<8x16x4xf32>
    %6 = vector.shape_cast %5 : vector<8x16x4xf32> to vector<128x4xf32>
    %c0_i32_2 = arith.constant 0 : i32
    %7 = arith.addi %1, %c0_i32_2 : i32
    %c0_3 = arith.constant 0 : index
    %8 = arith.index_cast %7 : i32 to index
    %c1 = arith.constant 1 : index
    %c0_4 = arith.constant 0 : index
    %9 = vector.load %arg2[%c0_3, %8, %c1, %c0_4] : memref<1x18x18x4xf32, #tpu.memory_space<vmem>>, vector<1x8x16x4xf32>
    %10 = vector.shape_cast %9 : vector<1x8x16x4xf32> to vector<8x16x4xf32>
    %11 = vector.shape_cast %10 : vector<8x16x4xf32> to vector<128x4xf32>
    %c0_i32_5 = arith.constant 0 : i32
    %12 = arith.addi %1, %c0_i32_5 : i32
    %c0_6 = arith.constant 0 : index
    %13 = arith.index_cast %12 : i32 to index
    %c2 = arith.constant 2 : index
    %c0_7 = arith.constant 0 : index
    %14 = vector.load %arg2[%c0_6, %13, %c2, %c0_7] : memref<1x18x18x4xf32, #tpu.memory_space<vmem>>, vector<1x8x16x4xf32>
    %15 = vector.shape_cast %14 : vector<1x8x16x4xf32> to vector<8x16x4xf32>
    %16 = vector.shape_cast %15 : vector<8x16x4xf32> to vector<128x4xf32>
    %c1_i32 = arith.constant 1 : i32
    %17 = arith.addi %1, %c1_i32 : i32
    %c0_8 = arith.constant 0 : index
    %18 = arith.index_cast %17 : i32 to index
    %c0_9 = arith.constant 0 : index
    %c0_10 = arith.constant 0 : index
    %19 = vector.load %arg2[%c0_8, %18, %c0_9, %c0_10] : memref<1x18x18x4xf32, #tpu.memory_space<vmem>>, vector<1x8x16x4xf32>
    %20 = vector.shape_cast %19 : vector<1x8x16x4xf32> to vector<8x16x4xf32>
    %21 = vector.shape_cast %20 : vector<8x16x4xf32> to vector<128x4xf32>
    %c1_i32_11 = arith.constant 1 : i32
    %22 = arith.addi %1, %c1_i32_11 : i32
    %c0_12 = arith.constant 0 : index
    %23 = arith.index_cast %22 : i32 to index
    %c1_13 = arith.constant 1 : index
    %c0_14 = arith.constant 0 : index
    %24 = vector.load %arg2[%c0_12, %23, %c1_13, %c0_14] : memref<1x18x18x4xf32, #tpu.memory_space<vmem>>, vector<1x8x16x4xf32>
    %25 = vector.shape_cast %24 : vector<1x8x16x4xf32> to vector<8x16x4xf32>
    %26 = vector.shape_cast %25 : vector<8x16x4xf32> to vector<128x4xf32>
    %c1_i32_15 = arith.constant 1 : i32
    %27 = arith.addi %1, %c1_i32_15 : i32
    %c0_16 = arith.constant 0 : index
    %28 = arith.index_cast %27 : i32 to index
    %c2_17 = arith.constant 2 : index
    %c0_18 = arith.constant 0 : index
    %29 = vector.load %arg2[%c0_16, %28, %c2_17, %c0_18] : memref<1x18x18x4xf32, #tpu.memory_space<vmem>>, vector<1x8x16x4xf32>
    %30 = vector.shape_cast %29 : vector<1x8x16x4xf32> to vector<8x16x4xf32>
    %31 = vector.shape_cast %30 : vector<8x16x4xf32> to vector<128x4xf32>
    %c2_i32 = arith.constant 2 : i32
    %32 = arith.addi %1, %c2_i32 : i32
    %c0_19 = arith.constant 0 : index
    %33 = arith.index_cast %32 : i32 to index
    %c0_20 = arith.constant 0 : index
    %c0_21 = arith.constant 0 : index
    %34 = vector.load %arg2[%c0_19, %33, %c0_20, %c0_21] : memref<1x18x18x4xf32, #tpu.memory_space<vmem>>, vector<1x8x16x4xf32>
    %35 = vector.shape_cast %34 : vector<1x8x16x4xf32> to vector<8x16x4xf32>
    %36 = vector.shape_cast %35 : vector<8x16x4xf32> to vector<128x4xf32>
    %c2_i32_22 = arith.constant 2 : i32
    %37 = arith.addi %1, %c2_i32_22 : i32
    %c0_23 = arith.constant 0 : index
    %38 = arith.index_cast %37 : i32 to index
    %c1_24 = arith.constant 1 : index
    %c0_25 = arith.constant 0 : index
    %39 = vector.load %arg2[%c0_23, %38, %c1_24, %c0_25] : memref<1x18x18x4xf32, #tpu.memory_space<vmem>>, vector<1x8x16x4xf32>
    %40 = vector.shape_cast %39 : vector<1x8x16x4xf32> to vector<8x16x4xf32>
    %41 = vector.shape_cast %40 : vector<8x16x4xf32> to vector<128x4xf32>
    %c2_i32_26 = arith.constant 2 : i32
    %42 = arith.addi %1, %c2_i32_26 : i32
    %c0_27 = arith.constant 0 : index
    %43 = arith.index_cast %42 : i32 to index
    %c2_28 = arith.constant 2 : index
    %c0_29 = arith.constant 0 : index
    %44 = vector.load %arg2[%c0_27, %43, %c2_28, %c0_29] : memref<1x18x18x4xf32, #tpu.memory_space<vmem>>, vector<1x8x16x4xf32>
    %45 = vector.shape_cast %44 : vector<1x8x16x4xf32> to vector<8x16x4xf32>
    %46 = vector.shape_cast %45 : vector<8x16x4xf32> to vector<128x4xf32>
    %47 = tpu.concatenate %6, %11, %16, %21, %26, %31, %36, %41, %46 in 1 : vector<128x4xf32>, vector<128x4xf32>, vector<128x4xf32>, vector<128x4xf32>, vector<128x4xf32>, vector<128x4xf32>, vector<128x4xf32>, vector<128x4xf32>, vector<128x4xf32> -> vector<128x36xf32>
    %c0_30 = arith.constant 0 : index
    %c0_31 = arith.constant 0 : index
    %48 = vector.load %arg3[%c0_30, %c0_31] : memref<36x128xf32, #tpu.memory_space<vmem>>, vector<36x128xf32>
    %cst = arith.constant dense<0.000000e+00> : vector<128x128xf32>
    %49 = tpu.matmul %47, %48, %cst {dimension_numbers = #tpu.dot_dimension_numbers<[1], [0], [0], [1], [0, 0, 1, 1], [], []>} : vector<128x36xf32>, vector<36x128xf32>, vector<128x128xf32> -> vector<128x128xf32>
    %c0_32 = arith.constant 0 : index
    %c0_33 = arith.constant 0 : index
    %50 = vector.load %arg4[%c0_32, %c0_33] : memref<1x128xf32, #tpu.memory_space<vmem>>, vector<1x128xf32>
    %51 = vector.broadcast %50 : vector<1x128xf32> to vector<128x128xf32>
    %52 = arith.addf %49, %51 : vector<128x128xf32>
    %53 = arith.negf %52 : vector<128x128xf32>
    %54 = math.exp %53 : vector<128x128xf32>
    %cst_34 = arith.constant 1.000000e+00 : f32
    %55 = vector.broadcast %cst_34 : f32 to vector<128x128xf32>
    %56 = arith.addf %55, %54 : vector<128x128xf32>
    %57 = arith.divf %55, %56 : vector<128x128xf32>
    %58 = arith.mulf %52, %57 : vector<128x128xf32>
    %59 = vector.shape_cast %58 : vector<128x128xf32> to vector<8x16x128xf32>
    %c0_35 = arith.constant 0 : index
    %c0_36 = arith.constant 0 : index
    %c0_37 = arith.constant 0 : index
    %c0_38 = arith.constant 0 : index
    %60 = vector.load %arg5[%c0_35, %c0_36, %c0_37, %c0_38] : memref<1x8x16x128xf32, #tpu.memory_space<vmem>>, vector<1x8x16x128xf32>
    %61 = vector.shape_cast %60 : vector<1x8x16x128xf32> to vector<8x16x128xf32>
    %62 = vector.shape_cast %59 : vector<8x16x128xf32> to vector<1x8x16x128xf32>
    tpu.vector_store %arg5[%c0_35, %c0_36, %c0_37, %c0_38], %62 {strides = array<i32>} : memref<1x8x16x128xf32, #tpu.memory_space<vmem>>, vector<1x8x16x128xf32>,
    return
  }
  func.func @transform_0(%arg0: i32, %arg1: i32) -> (i32, i32, i32, i32) {
    %c0_i32 = arith.constant 0 : i32
    %c0_i32_0 = arith.constant 0 : i32
    %c0_i32_1 = arith.constant 0 : i32
    %c0_i32_2 = arith.constant 0 : i32
    return %arg0, %c0_i32, %c0_i32_0, %c0_i32_1 : i32, i32, i32, i32
  }
  func.func @transform_1(%arg0: i32, %arg1: i32) -> (i32, i32) {
    %c0_i32 = arith.constant 0 : i32
    %c0_i32_0 = arith.constant 0 : i32
    %c0_i32_1 = arith.constant 0 : i32
    return %c0_i32, %c0_i32_0 : i32, i32
  }
  func.func @transform_2(%arg0: i32, %arg1: i32) -> (i32, i32) {
    %c0_i32 = arith.constant 0 : i32
    %c0_i32_0 = arith.constant 0 : i32
    %c0_i32_1 = arith.constant 0 : i32
    return %c0_i32, %c0_i32_0 : i32, i32
  }
  func.func @transform_3(%arg0: i32, %arg1: i32) -> (i32, i32, i32, i32) {
    %c0_i32 = arith.constant 0 : i32
    %c0_i32_0 = arith.constant 0 : i32
    %c0_i32_1 = arith.constant 0 : i32
    return %arg0, %arg1, %c0_i32, %c0_i32_0 : i32, i32, i32, i32
  }
}

</mosaic_0001>

<llo_original>
// kernel: tpu_custom_call.1
$region0: #{tpu_custom_call.1}
  #allocation0 [shape = 'u32[]', space=smem, size = 0x4, offset = 0x4, fixed_abs, tag = 'smem constant byte address 0x4 - core index']
  #allocation1 [shape = 'u32[144,128]{1,0:T(1,128)}', space=vmem, size = 0x12000, scoped, tag = 'internal scratch']
  %s0 = inlined_call_operand.vmem [shape: f32[2,18,18,4], index: 0, kind: input, shape index: {}]
  %s1 = inlined_call_operand.vmem [shape: f32[36,128], index: 1, kind: input, shape index: {}]
  %s2 = inlined_call_operand.vmem [shape: f32[1,128], index: 2, kind: input, shape index: {}]
  %s3 = inlined_call_operand.hbm [shape: f32[2,16,16,128], index: 3, kind: output, shape index: {}]
  %s4 = sld [smem:[#allocation0]]
  $region45: #{tpu_custom_call.1} parent=0
    _
  %s6 = ssub.s32 1, %s4
  %s7 = scalar_select 0, %s6, %s4
  $region1: #{tpu_custom_call.1} parent=0
    #allocation2 [shape = 'u8[131072]{0}', space=vmem, size = 0x20000, scoped, tag = 'output window, operand 0']
    #allocation3 [shape = 's32[2]{0}', space=sflag, size = 0x8, scoped, tag = 'scoped memory for tpu_custom_call.1']
    %8 = vsyncpa [#allocation3], 0
    %s9 = scalar_lea.sflag [#allocation3], 1
    %10 = vsyncpa %s9, 0
    loop: start=0, step=1, limit=6
    $region2: #{tpu_custom_call.1} parent=1 // loop_pre_header
      _
    $region3: #{tpu_custom_call.1} parent=1 // loop_header
      %s12 = sphi 0, %s16
      %p13 = scmp.ge.s32.totalorder %s12, 6
      %s19 = sphi 0, %s31
      %s20 = sphi 0, %s27
      %s21 = sphi 0, %s19
      %s22 = sphi 0, %s20
      %s23 = sphi 0, %s21
      %s24 = sphi 0, %s22
      %s34 = sphi 0, %s36
      %s37 = sphi 0, %s34
      %s38 = sphi 0, %s37
      %s54 = sphi 0, %s38
      %s58 = sphi 0, %s58
      %s60 = sphi 0, %s58
      %s61 = sphi 0, %s60
      %s75 = sphi 0, %s61
      %s79 = sphi 0, %s79
      %s81 = sphi 0, %s79
      %s82 = sphi 0, %s81
      %s96 = sphi 0, %s82
      %s104 = sphi 0, %s106
      %s107 = sphi 0, %s104
      %s108 = sphi 0, %s107
      %s124 = sphi 0, %s108
    $region4: #{tpu_custom_call.1} parent=1 // loop_header_branch
      %15 = sbr.rel (%p13) target = $region8
    $region5: #{tpu_custom_call.1} parent=1 // loop_body
      %s17 = ssub.s32 %s12, 1
      %s18 = ssub.s32 %s12, 2
      %s25 = sadd.s32 1, %s20
      %p26 = scmp.ge.s32.totalorder %s25, 2
      %s27 = scalar_select %p26, 0, %s25
      %s28 = sadd.s32 1, %s19
      %s29 = scalar_select %p26, %s28, %s19
      %p30 = scmp.ge.s32.totalorder %s29, 2
      %s31 = scalar_select %p30, 0, %s29
      %s32 = ssub.s32 %s19, %s31
      %p33 = scmp.eq.s32.totalorder %s32, 0
      %s35 = sadd.s32 %s34, 1
      %s36 = scalar_select %p33, %s34, %s35
      %p39 = pneg %p33
      %p40 = scmp.eq.s32.totalorder %s12, 3
      %p41 = por %p39, %p40
      %p42 = scmp.ne.s32.totalorder %s34, %s37
      %p43 = scmp.eq.s32.totalorder %s12, 0
      %p44 = por %p42, %p43
      %p45 = scmp.ne.s32.totalorder %s34, %s37
      %p46 = scmp.eq.s32.totalorder %s17, 3
      %p47 = por %p45, %p46
      %p48 = scmp.ne.s32.totalorder %s37, %s38
      %p49 = scmp.eq.s32.totalorder %s17, 0
      %p50 = por %p48, %p49
      %p51 = scmp.ne.s32.totalorder %s37, %s38
      %p52 = scmp.eq.s32.totalorder %s18, 3
      %p53 = por %p51, %p52
      %p55 = scmp.ne.s32.totalorder %s38, %s54
      %p56 = scmp.eq.s32.totalorder %s18, 0
      %p57 = por %p55, %p56
      %s59 = sadd.s32 %s58, 1
      %p62 = scmp.eq.s32.totalorder %s12, 3
      %p63 = scmp.ne.s32.totalorder %s58, %s60
      %p64 = scmp.eq.s32.totalorder %s12, 0
      %p65 = por %p63, %p64
      %p66 = scmp.ne.s32.totalorder %s58, %s60
      %p67 = scmp.eq.s32.totalorder %s17, 3
      %p68 = por %p66, %p67
      %p69 = scmp.ne.s32.totalorder %s60, %s61
      %p70 = scmp.eq.s32.totalorder %s17, 0
      %p71 = por %p69, %p70
      %p72 = scmp.ne.s32.totalorder %s60, %s61
      %p73 = scmp.eq.s32.totalorder %s18, 3
      %p74 = por %p72, %p73
      %p76 = scmp.ne.s32.totalorder %s61, %s75
      %p77 = scmp.eq.s32.totalorder %s18, 0
      %p78 = por %p76, %p77
      %s80 = sadd.s32 %s79, 1
      %p83 = scmp.eq.s32.totalorder %s12, 3
      %p84 = scmp.ne.s32.totalorder %s79, %s81
      %p85 = scmp.eq.s32.totalorder %s12, 0
      %p86 = por %p84, %p85
      %p87 = scmp.ne.s32.totalorder %s79, %s81
      %p88 = scmp.eq.s32.totalorder %s17, 3
      %p89 = por %p87, %p88
      %p90 = scmp.ne.s32.totalorder %s81, %s82
      %p91 = scmp.eq.s32.totalorder %s17, 0
      %p92 = por %p90, %p91
      %p93 = scmp.ne.s32.totalorder %s81, %s82
      %p94 = scmp.eq.s32.totalorder %s18, 3
      %p95 = por %p93, %p94
      %p97 = scmp.ne.s32.totalorder %s82, %s96
      %p98 = scmp.eq.s32.totalorder %s18, 0
      %p99 = por %p97, %p98
      %s100 = ssub.s32 %s19, %s31
      %s101 = ssub.s32 %s20, %s27
      %s102 = sor.u32 %s100, %s101
      %p103 = scmp.eq.s32.totalorder %s102, 0
      %s105 = sadd.s32 %s104, 1
      %s106 = scalar_select %p103, %s104, %s105
      %p109 = pneg %p103
      %p110 = scmp.eq.s32.totalorder %s12, 3
      %p111 = por %p109, %p110
      %p112 = scmp.ne.s32.totalorder %s104, %s107
      %p113 = scmp.eq.s32.totalorder %s12, 0
      %p114 = por %p112, %p113
      %p115 = scmp.ne.s32.totalorder %s104, %s107
      %p116 = scmp.eq.s32.totalorder %s17, 3
      %p117 = por %p115, %p116
      %p118 = scmp.ne.s32.totalorder %s107, %s108
      %p119 = scmp.eq.s32.totalorder %s17, 0
      %p120 = por %p118, %p119
      %p121 = scmp.ne.s32.totalorder %s107, %s108
      %p122 = scmp.eq.s32.totalorder %s18, 3
      %p123 = por %p121, %p122
      %p125 = scmp.ne.s32.totalorder %s108, %s124
      %p126 = scmp.eq.s32.totalorder %s18, 0
      %p127 = por %p125, %p126
      %p128 = scmp.le.s32.totalorder 1, %s12
      %p129 = scmp.lt.s32.totalorder %s12, 5
      %p130 = pnand %p128, %p129
      %p131 = pneg %p130
      // Predicated region
      $region9: #{tpu_custom_call.1} parent=5 // pred_check
        _
      $region10: #{tpu_custom_call.1} parent=5 // pred_check_branch
        %133 = sbr.rel (%p130) target = $region12
      $region11: #{tpu_custom_call.1} parent=5 // pred_region
        %s134 = ssub.s32 %s12, 1
        // Predicated region
        $region13: #{tpu_custom_call.1} parent=11 // pred_check
          %p135 = pneg %p71
        $region14: #{tpu_custom_call.1} parent=11 // pred_check_branch
          %137 = sbr.rel (%p135) target = $region16
        $region15: #{tpu_custom_call.1} parent=11 // pred_region
          _
        $region16: #{tpu_custom_call.1} parent=11 // pred_fallthru
          _
        // Predicated region
        $region17: #{tpu_custom_call.1} parent=11 // pred_check
          %p138 = pneg %p92
        $region18: #{tpu_custom_call.1} parent=11 // pred_check_branch
          %140 = sbr.rel (%p138) target = $region20
        $region19: #{tpu_custom_call.1} parent=11 // pred_region
          _
        $region20: #{tpu_custom_call.1} parent=11 // pred_fallthru
          _
      $region12: #{tpu_custom_call.1} parent=5 // pred_fallthru
        _
      %p141 = scmp.lt.s32.totalorder %s12, 4
      // Predicated region
      $region21: #{tpu_custom_call.1} parent=5 // pred_check
        %p142 = pneg %p141
      $region22: #{tpu_custom_call.1} parent=5 // pred_check_branch
        %144 = sbr.rel (%p142) target = $region24
      $region23: #{tpu_custom_call.1} parent=5 // pred_region
        // Predicated region
        $region25: #{tpu_custom_call.1} parent=23 // pred_check
          %p145 = pneg %p44
        $region26: #{tpu_custom_call.1} parent=23 // pred_check_branch
          %147 = sbr.rel (%p145) target = $region28
        $region27: #{tpu_custom_call.1} parent=23 // pred_region
          %p148 = scmp.lt.s32.totalorder %s19, 1
          %s149 = scalar_select %p148, %s19, 1
          %s150 = smul.addr %s149, 54
          %s151 = smul.addr %s150, 8
          %s152 = scalar_lea.vmem %s0, %s151
        $region28: #{tpu_custom_call.1} parent=23 // pred_fallthru
          _
      $region24: #{tpu_custom_call.1} parent=5 // pred_fallthru
        _
      %p153 = scmp.le.s32.totalorder 1, %s12
      %p154 = scmp.lt.s32.totalorder %s12, 5
      %p155 = pnand %p153, %p154
      %p156 = pneg %p155
      // Predicated region
      $region29: #{tpu_custom_call.1} parent=5 // pred_check
        _
      $region30: #{tpu_custom_call.1} parent=5 // pred_check_branch
        %158 = sbr.rel (%p155) target = $region32
      $region31: #{tpu_custom_call.1} parent=5 // pred_region
        %s159 = ssub.s32 %s12, 1
        %p160 = scmp.lt.s32.totalorder %s21, 1
        %s161 = scalar_select %p160, %s21, 1
        %s162 = smul.addr %s161, 54
        %s163 = smul.addr %s162, 8
        %s164 = scalar_lea.vmem %s0, %s163
        %p165 = pneg %p50
        %p166 = pneg %p47
        %p167 = pneg %p71
        %p168 = pneg %p68
        %p169 = pneg %p92
        %p170 = pneg %p89
        %p171 = pneg %p120
        %p172 = pneg %p117
        %s173 = sand.u32 %s107, 1
        %s174 = scalar_lea.sflag [#allocation3], %s173
        %s175 = sand.u32 %s107, 1
        %s176 = smul.addr %s175, 128
        %s177 = scalar_lea.vmem [#allocation2], %s176
        %p178 = scmp.lt.s32.totalorder %s21, 1
        %s179 = scalar_select %p178, %s21, 1
        %s180 = smul.addr %s179, 54
        %s181 = smul.addr %s180, 8
        %s182 = scalar_lea.vmem %s0, %s181
        %s183 = smul.u32 8, %s22
        %s184 = smul.u32 %s22, 8
        %s185 = smul.u32 %s184, 24
        %s186 = scalar_lea.vmem %s182, %s185
        %v187 = vld [vmem:[%s186] sm:$0xff]
        %v188 = vld [vmem:[%s186 + $0x8] sm:$0xff]
        %v189 = vld [vmem:[%s186 + $0x18] sm:$0xff]
        %v190 = vld [vmem:[%s186 + $0x20] sm:$0xff]
        %v191 = vld [vmem:[%s186 + $0x30] sm:$0xff]
        %v192 = vld [vmem:[%s186 + $0x38] sm:$0xff]
        %v193 = vld [vmem:[%s186 + $0x48] sm:$0xff]
        %v194 = vld [vmem:[%s186 + $0x50] sm:$0xff]
        %v195 = vld [vmem:[%s186 + $0x60] sm:$0xff]
        %v196 = vld [vmem:[%s186 + $0x68] sm:$0xff]
        %v197 = vld [vmem:[%s186 + $0x78] sm:$0xff]
        %v198 = vld [vmem:[%s186 + $0x80] sm:$0xff]
        %v199 = vld [vmem:[%s186 + $0x90] sm:$0xff]
        %v200 = vld [vmem:[%s186 + $0x98] sm:$0xff]
        %v201 = vld [vmem:[%s186 + $0xa8] sm:$0xff]
        %v202 = vld [vmem:[%s186 + $0xb0] sm:$0xff]
        %v203 = vld [vmem:[%s186 + $0x1] sm:$0xff]
        %v204 = vld [vmem:[%s186 + $0x9] sm:$0xff]
        %v205 = vld [vmem:[%s186 + $0x19] sm:$0xff]
        %v206 = vld [vmem:[%s186 + $0x21] sm:$0xff]
        %v207 = vld [vmem:[%s186 + $0x31] sm:$0xff]
        %v208 = vld [vmem:[%s186 + $0x39] sm:$0xff]
        %v209 = vld [vmem:[%s186 + $0x49] sm:$0xff]
        %v210 = vld [vmem:[%s186 + $0x51] sm:$0xff]
        %v211 = vld [vmem:[%s186 + $0x61] sm:$0xff]
        %v212 = vld [vmem:[%s186 + $0x69] sm:$0xff]
        %v213 = vld [vmem:[%s186 + $0x79] sm:$0xff]
        %v214 = vld [vmem:[%s186 + $0x81] sm:$0xff]
        %v215 = vld [vmem:[%s186 + $0x91] sm:$0xff]
        %v216 = vld [vmem:[%s186 + $0x99] sm:$0xff]
        %v217 = vld [vmem:[%s186 + $0xa9] sm:$0xff]
        %v218 = vld [vmem:[%s186 + $0xb1] sm:$0xff]
        %v219 = vld [vmem:[%s186 + $0x2] sm:$0xff]
        %v220 = vld [vmem:[%s186 + $0xa] sm:$0xff]
        %v221 = vld [vmem:[%s186 + $0x1a] sm:$0xff]
        %v222 = vld [vmem:[%s186 + $0x22] sm:$0xff]
        %v223 = vld [vmem:[%s186 + $0x32] sm:$0xff]
        %v224 = vld [vmem:[%s186 + $0x3a] sm:$0xff]
        %v225 = vld [vmem:[%s186 + $0x4a] sm:$0xff]
        %v226 = vld [vmem:[%s186 + $0x52] sm:$0xff]
        %v227 = vld [vmem:[%s186 + $0x62] sm:$0xff]
        %v228 = vld [vmem:[%s186 + $0x6a] sm:$0xff]
        %v229 = vld [vmem:[%s186 + $0x7a] sm:$0xff]
        %v230 = vld [vmem:[%s186 + $0x82] sm:$0xff]
        %v231 = vld [vmem:[%s186 + $0x92] sm:$0xff]
        %v232 = vld [vmem:[%s186 + $0x9a] sm:$0xff]
        %v233 = vld [vmem:[%s186 + $0xaa] sm:$0xff]
        %v234 = vld [vmem:[%s186 + $0xb2] sm:$0xff]
        %s235 = sadd.s32 %s184, 1
        %s236 = smul.u32 %s235, 24
        %s237 = scalar_lea.vmem %s182, %s236
        %v238 = vld [vmem:[%s237] sm:$0xff]
        %v239 = vld [vmem:[%s237 + $0x8] sm:$0xff]
        %v240 = vld [vmem:[%s237 + $0x18] sm:$0xff]
        %v241 = vld [vmem:[%s237 + $0x20] sm:$0xff]
        %v242 = vld [vmem:[%s237 + $0x30] sm:$0xff]
        %v243 = vld [vmem:[%s237 + $0x38] sm:$0xff]
        %v244 = vld [vmem:[%s237 + $0x48] sm:$0xff]
        %v245 = vld [vmem:[%s237 + $0x50] sm:$0xff]
        %v246 = vld [vmem:[%s237 + $0x60] sm:$0xff]
        %v247 = vld [vmem:[%s237 + $0x68] sm:$0xff]
        %v248 = vld [vmem:[%s237 + $0x78] sm:$0xff]
        %v249 = vld [vmem:[%s237 + $0x80] sm:$0xff]
        %v250 = vld [vmem:[%s237 + $0x90] sm:$0xff]
        %v251 = vld [vmem:[%s237 + $0x98] sm:$0xff]
        %v252 = vld [vmem:[%s237 + $0xa8] sm:$0xff]
        %v253 = vld [vmem:[%s237 + $0xb0] sm:$0xff]
        %v254 = vld [vmem:[%s237 + $0x1] sm:$0xff]
        %v255 = vld [vmem:[%s237 + $0x9] sm:$0xff]
        %v256 = vld [vmem:[%s237 + $0x19] sm:$0xff]
        %v257 = vld [vmem:[%s237 + $0x21] sm:$0xff]
        %v258 = vld [vmem:[%s237 + $0x31] sm:$0xff]
        %v259 = vld [vmem:[%s237 + $0x39] sm:$0xff]
        %v260 = vld [vmem:[%s237 + $0x49] sm:$0xff]
        %v261 = vld [vmem:[%s237 + $0x51] sm:$0xff]
        %v262 = vld [vmem:[%s237 + $0x61] sm:$0xff]
        %v263 = vld [vmem:[%s237 + $0x69] sm:$0xff]
        %v264 = vld [vmem:[%s237 + $0x79] sm:$0xff]
        %v265 = vld [vmem:[%s237 + $0x81] sm:$0xff]
        %v266 = vld [vmem:[%s237 + $0x91] sm:$0xff]
        %v267 = vld [vmem:[%s237 + $0x99] sm:$0xff]
        %v268 = vld [vmem:[%s237 + $0xa9] sm:$0xff]
        %v269 = vld [vmem:[%s237 + $0xb1] sm:$0xff]
        %v270 = vld [vmem:[%s237 + $0x2] sm:$0xff]
        %v271 = vld [vmem:[%s237 + $0xa] sm:$0xff]
        %v272 = vld [vmem:[%s237 + $0x1a] sm:$0xff]
        %v273 = vld [vmem:[%s237 + $0x22] sm:$0xff]
        %v274 = vld [vmem:[%s237 + $0x32] sm:$0xff]
        %v275 = vld [vmem:[%s237 + $0x3a] sm:$0xff]
        %v276 = vld [vmem:[%s237 + $0x4a] sm:$0xff]
        %v277 = vld [vmem:[%s237 + $0x52] sm:$0xff]
        %v278 = vld [vmem:[%s237 + $0x62] sm:$0xff]
        %v279 = vld [vmem:[%s237 + $0x6a] sm:$0xff]
        %v280 = vld [vmem:[%s237 + $0x7a] sm:$0xff]
        %v281 = vld [vmem:[%s237 + $0x82] sm:$0xff]
        %v282 = vld [vmem:[%s237 + $0x92] sm:$0xff]
        %v283 = vld [vmem:[%s237 + $0x9a] sm:$0xff]
        %v284 = vld [vmem:[%s237 + $0xaa] sm:$0xff]
        %v285 = vld [vmem:[%s237 + $0xb2] sm:$0xff]
        %s286 = sadd.s32 %s184, 2
        %s287 = smul.u32 %s286, 24
        %s288 = scalar_lea.vmem %s182, %s287
        %v289 = vld [vmem:[%s288] sm:$0xff]
        %v290 = vld [vmem:[%s288 + $0x8] sm:$0xff]
        %v291 = vld [vmem:[%s288 + $0x18] sm:$0xff]
        %v292 = vld [vmem:[%s288 + $0x20] sm:$0xff]
        %v293 = vld [vmem:[%s288 + $0x30] sm:$0xff]
        %v294 = vld [vmem:[%s288 + $0x38] sm:$0xff]
        %v295 = vld [vmem:[%s288 + $0x48] sm:$0xff]
        %v296 = vld [vmem:[%s288 + $0x50] sm:$0xff]
        %v297 = vld [vmem:[%s288 + $0x60] sm:$0xff]
        %v298 = vld [vmem:[%s288 + $0x68] sm:$0xff]
        %v299 = vld [vmem:[%s288 + $0x78] sm:$0xff]
        %v300 = vld [vmem:[%s288 + $0x80] sm:$0xff]
        %v301 = vld [vmem:[%s288 + $0x90] sm:$0xff]
        %v302 = vld [vmem:[%s288 + $0x98] sm:$0xff]
        %v303 = vld [vmem:[%s288 + $0xa8] sm:$0xff]
        %v304 = vld [vmem:[%s288 + $0xb0] sm:$0xff]
        %v305 = vld [vmem:[%s288 + $0x1] sm:$0xff]
        %v306 = vld [vmem:[%s288 + $0x9] sm:$0xff]
        %v307 = vld [vmem:[%s288 + $0x19] sm:$0xff]
        %v308 = vld [vmem:[%s288 + $0x21] sm:$0xff]
        %v309 = vld [vmem:[%s288 + $0x31] sm:$0xff]
        %v310 = vld [vmem:[%s288 + $0x39] sm:$0xff]
        %v311 = vld [vmem:[%s288 + $0x49] sm:$0xff]
        %v312 = vld [vmem:[%s288 + $0x51] sm:$0xff]
        %v313 = vld [vmem:[%s288 + $0x61] sm:$0xff]
        %v314 = vld [vmem:[%s288 + $0x69] sm:$0xff]
        %v315 = vld [vmem:[%s288 + $0x79] sm:$0xff]
        %v316 = vld [vmem:[%s288 + $0x81] sm:$0xff]
        %v317 = vld [vmem:[%s288 + $0x91] sm:$0xff]
        %v318 = vld [vmem:[%s288 + $0x99] sm:$0xff]
        %v319 = vld [vmem:[%s288 + $0xa9] sm:$0xff]
        %v320 = vld [vmem:[%s288 + $0xb1] sm:$0xff]
        %v321 = vld [vmem:[%s288 + $0x2] sm:$0xff]
        %v322 = vld [vmem:[%s288 + $0xa] sm:$0xff]
        %v323 = vld [vmem:[%s288 + $0x1a] sm:$0xff]
        %v324 = vld [vmem:[%s288 + $0x22] sm:$0xff]
        %v325 = vld [vmem:[%s288 + $0x32] sm:$0xff]
        %v326 = vld [vmem:[%s288 + $0x3a] sm:$0xff]
        %v327 = vld [vmem:[%s288 + $0x4a] sm:$0xff]
        %v328 = vld [vmem:[%s288 + $0x52] sm:$0xff]
        %v329 = vld [vmem:[%s288 + $0x62] sm:$0xff]
        %v330 = vld [vmem:[%s288 + $0x6a] sm:$0xff]
        %v331 = vld [vmem:[%s288 + $0x7a] sm:$0xff]
        %v332 = vld [vmem:[%s288 + $0x82] sm:$0xff]
        %v333 = vld [vmem:[%s288 + $0x92] sm:$0xff]
        %v334 = vld [vmem:[%s288 + $0x9a] sm:$0xff]
        %v335 = vld [vmem:[%s288 + $0xaa] sm:$0xff]
        %v336 = vld [vmem:[%s288 + $0xb2] sm:$0xff]
        %353 = vrot.lane.b32.xlu0 %v203, 4
        %v354 = vpop.permute.xlu0 %353
        %355 = vrot.lane.b32.xlu0 %v204, 4
        %v356 = vpop.permute.xlu0 %355
        %357 = vrot.lane.b32.xlu0 %v205, 4
        %v358 = vpop.permute.xlu0 %357
        %359 = vrot.lane.b32.xlu0 %v206, 4
        %v360 = vpop.permute.xlu0 %359
        %361 = vrot.lane.b32.xlu0 %v207, 4
        %v362 = vpop.permute.xlu0 %361
        %363 = vrot.lane.b32.xlu0 %v208, 4
        %v364 = vpop.permute.xlu0 %363
        %365 = vrot.lane.b32.xlu0 %v209, 4
        %v366 = vpop.permute.xlu0 %365
        %367 = vrot.lane.b32.xlu0 %v210, 4
        %v368 = vpop.permute.xlu0 %367
        %369 = vrot.lane.b32.xlu0 %v211, 4
        %v370 = vpop.permute.xlu0 %369
        %371 = vrot.lane.b32.xlu0 %v212, 4
        %v372 = vpop.permute.xlu0 %371
        %373 = vrot.lane.b32.xlu0 %v213, 4
        %v374 = vpop.permute.xlu0 %373
        %375 = vrot.lane.b32.xlu0 %v214, 4
        %v376 = vpop.permute.xlu0 %375
        %377 = vrot.lane.b32.xlu0 %v215, 4
        %v378 = vpop.permute.xlu0 %377
        %379 = vrot.lane.b32.xlu0 %v216, 4
        %v380 = vpop.permute.xlu0 %379
        %381 = vrot.lane.b32.xlu0 %v217, 4
        %v382 = vpop.permute.xlu0 %381
        %383 = vrot.lane.b32.xlu0 %v218, 4
        %v384 = vpop.permute.xlu0 %383
        %417 = vrot.lane.b32.xlu0 %v219, 8
        %v418 = vpop.permute.xlu0 %417
        %419 = vrot.lane.b32.xlu0 %v220, 8
        %v420 = vpop.permute.xlu0 %419
        %421 = vrot.lane.b32.xlu0 %v221, 8
        %v422 = vpop.permute.xlu0 %421
        %423 = vrot.lane.b32.xlu0 %v222, 8
        %v424 = vpop.permute.xlu0 %423
        %425 = vrot.lane.b32.xlu0 %v223, 8
        %v426 = vpop.permute.xlu0 %425
        %427 = vrot.lane.b32.xlu0 %v224, 8
        %v428 = vpop.permute.xlu0 %427
        %429 = vrot.lane.b32.xlu0 %v225, 8
        %v430 = vpop.permute.xlu0 %429
        %431 = vrot.lane.b32.xlu0 %v226, 8
        %v432 = vpop.permute.xlu0 %431
        %433 = vrot.lane.b32.xlu0 %v227, 8
        %v434 = vpop.permute.xlu0 %433
        %435 = vrot.lane.b32.xlu0 %v228, 8
        %v436 = vpop.permute.xlu0 %435
        %437 = vrot.lane.b32.xlu0 %v229, 8
        %v438 = vpop.permute.xlu0 %437
        %439 = vrot.lane.b32.xlu0 %v230, 8
        %v440 = vpop.permute.xlu0 %439
        %441 = vrot.lane.b32.xlu0 %v231, 8
        %v442 = vpop.permute.xlu0 %441
        %443 = vrot.lane.b32.xlu0 %v232, 8
        %v444 = vpop.permute.xlu0 %443
        %445 = vrot.lane.b32.xlu0 %v233, 8
        %v446 = vpop.permute.xlu0 %445
        %447 = vrot.lane.b32.xlu0 %v234, 8
        %v448 = vpop.permute.xlu0 %447
        %481 = vrot.lane.b32.xlu0 %v238, 12
        %v482 = vpop.permute.xlu0 %481
        %483 = vrot.lane.b32.xlu0 %v239, 12
        %v484 = vpop.permute.xlu0 %483
        %485 = vrot.lane.b32.xlu0 %v240, 12
        %v486 = vpop.permute.xlu0 %485
        %487 = vrot.lane.b32.xlu0 %v241, 12
        %v488 = vpop.permute.xlu0 %487
        %489 = vrot.lane.b32.xlu0 %v242, 12
        %v490 = vpop.permute.xlu0 %489
        %491 = vrot.lane.b32.xlu0 %v243, 12
        %v492 = vpop.permute.xlu0 %491
        %493 = vrot.lane.b32.xlu0 %v244, 12
        %v494 = vpop.permute.xlu0 %493
        %495 = vrot.lane.b32.xlu0 %v245, 12
        %v496 = vpop.permute.xlu0 %495
        %497 = vrot.lane.b32.xlu0 %v246, 12
        %v498 = vpop.permute.xlu0 %497
        %499 = vrot.lane.b32.xlu0 %v247, 12
        %v500 = vpop.permute.xlu0 %499
        %501 = vrot.lane.b32.xlu0 %v248, 12
        %v502 = vpop.permute.xlu0 %501
        %503 = vrot.lane.b32.xlu0 %v249, 12
        %v504 = vpop.permute.xlu0 %503
        %505 = vrot.lane.b32.xlu0 %v250, 12
        %v506 = vpop.permute.xlu0 %505
        %507 = vrot.lane.b32.xlu0 %v251, 12
        %v508 = vpop.permute.xlu0 %507
        %509 = vrot.lane.b32.xlu0 %v252, 12
        %v510 = vpop.permute.xlu0 %509
        %511 = vrot.lane.b32.xlu0 %v253, 12
        %v512 = vpop.permute.xlu0 %511
        %545 = vrot.lane.b32.xlu0 %v254, 16
        %v546 = vpop.permute.xlu0 %545
        %547 = vrot.lane.b32.xlu0 %v255, 16
        %v548 = vpop.permute.xlu0 %547
        %549 = vrot.lane.b32.xlu0 %v256, 16
        %v550 = vpop.permute.xlu0 %549
        %551 = vrot.lane.b32.xlu0 %v257, 16
        %v552 = vpop.permute.xlu0 %551
        %553 = vrot.lane.b32.xlu0 %v258, 16
        %v554 = vpop.permute.xlu0 %553
        %555 = vrot.lane.b32.xlu0 %v259, 16
        %v556 = vpop.permute.xlu0 %555
        %557 = vrot.lane.b32.xlu0 %v260, 16
        %v558 = vpop.permute.xlu0 %557
        %559 = vrot.lane.b32.xlu0 %v261, 16
        %v560 = vpop.permute.xlu0 %559
        %561 = vrot.lane.b32.xlu0 %v262, 16
        %v562 = vpop.permute.xlu0 %561
        %563 = vrot.lane.b32.xlu0 %v263, 16
        %v564 = vpop.permute.xlu0 %563
        %565 = vrot.lane.b32.xlu0 %v264, 16
        %v566 = vpop.permute.xlu0 %565
        %567 = vrot.lane.b32.xlu0 %v265, 16
        %v568 = vpop.permute.xlu0 %567
        %569 = vrot.lane.b32.xlu0 %v266, 16
        %v570 = vpop.permute.xlu0 %569
        %571 = vrot.lane.b32.xlu0 %v267, 16
        %v572 = vpop.permute.xlu0 %571
        %573 = vrot.lane.b32.xlu0 %v268, 16
        %v574 = vpop.permute.xlu0 %573
        %575 = vrot.lane.b32.xlu0 %v269, 16
        %v576 = vpop.permute.xlu0 %575
        %609 = vrot.lane.b32.xlu0 %v270, 20
        %v610 = vpop.permute.xlu0 %609
        %611 = vrot.lane.b32.xlu0 %v271, 20
        %v612 = vpop.permute.xlu0 %611
        %613 = vrot.lane.b32.xlu0 %v272, 20
        %v614 = vpop.permute.xlu0 %613
        %615 = vrot.lane.b32.xlu0 %v273, 20
        %v616 = vpop.permute.xlu0 %615
        %617 = vrot.lane.b32.xlu0 %v274, 20
        %v618 = vpop.permute.xlu0 %617
        %619 = vrot.lane.b32.xlu0 %v275, 20
        %v620 = vpop.permute.xlu0 %619
        %621 = vrot.lane.b32.xlu0 %v276, 20
        %v622 = vpop.permute.xlu0 %621
        %623 = vrot.lane.b32.xlu0 %v277, 20
        %v624 = vpop.permute.xlu0 %623
        %625 = vrot.lane.b32.xlu0 %v278, 20
        %v626 = vpop.permute.xlu0 %625
        %627 = vrot.lane.b32.xlu0 %v279, 20
        %v628 = vpop.permute.xlu0 %627
        %629 = vrot.lane.b32.xlu0 %v280, 20
        %v630 = vpop.permute.xlu0 %629
        %631 = vrot.lane.b32.xlu0 %v281, 20
        %v632 = vpop.permute.xlu0 %631
        %633 = vrot.lane.b32.xlu0 %v282, 20
        %v634 = vpop.permute.xlu0 %633
        %635 = vrot.lane.b32.xlu0 %v283, 20
        %v636 = vpop.permute.xlu0 %635
        %637 = vrot.lane.b32.xlu0 %v284, 20
        %v638 = vpop.permute.xlu0 %637
        %639 = vrot.lane.b32.xlu0 %v285, 20
        %v640 = vpop.permute.xlu0 %639
        %673 = vrot.lane.b32.xlu0 %v289, 24
        %v674 = vpop.permute.xlu0 %673
        %675 = vrot.lane.b32.xlu0 %v290, 24
        %v676 = vpop.permute.xlu0 %675
        %677 = vrot.lane.b32.xlu0 %v291, 24
        %v678 = vpop.permute.xlu0 %677
        %679 = vrot.lane.b32.xlu0 %v292, 24
        %v680 = vpop.permute.xlu0 %679
        %681 = vrot.lane.b32.xlu0 %v293, 24
        %v682 = vpop.permute.xlu0 %681
        %683 = vrot.lane.b32.xlu0 %v294, 24
        %v684 = vpop.permute.xlu0 %683
        %685 = vrot.lane.b32.xlu0 %v295, 24
        %v686 = vpop.permute.xlu0 %685
        %687 = vrot.lane.b32.xlu0 %v296, 24
        %v688 = vpop.permute.xlu0 %687
        %689 = vrot.lane.b32.xlu0 %v297, 24
        %v690 = vpop.permute.xlu0 %689
        %691 = vrot.lane.b32.xlu0 %v298, 24
        %v692 = vpop.permute.xlu0 %691
        %693 = vrot.lane.b32.xlu0 %v299, 24
        %v694 = vpop.permute.xlu0 %693
        %695 = vrot.lane.b32.xlu0 %v300, 24
        %v696 = vpop.permute.xlu0 %695
        %697 = vrot.lane.b32.xlu0 %v301, 24
        %v698 = vpop.permute.xlu0 %697
        %699 = vrot.lane.b32.xlu0 %v302, 24
        %v700 = vpop.permute.xlu0 %699
        %701 = vrot.lane.b32.xlu0 %v303, 24
        %v702 = vpop.permute.xlu0 %701
        %703 = vrot.lane.b32.xlu0 %v304, 24
        %v704 = vpop.permute.xlu0 %703
        %737 = vrot.lane.b32.xlu0 %v305, 28
        %v738 = vpop.permute.xlu0 %737
        %739 = vrot.lane.b32.xlu0 %v306, 28
        %v740 = vpop.permute.xlu0 %739
        %741 = vrot.lane.b32.xlu0 %v307, 28
        %v742 = vpop.permute.xlu0 %741
        %743 = vrot.lane.b32.xlu0 %v308, 28
        %v744 = vpop.permute.xlu0 %743
        %745 = vrot.lane.b32.xlu0 %v309, 28
        %v746 = vpop.permute.xlu0 %745
        %747 = vrot.lane.b32.xlu0 %v310, 28
        %v748 = vpop.permute.xlu0 %747
        %749 = vrot.lane.b32.xlu0 %v311, 28
        %v750 = vpop.permute.xlu0 %749
        %751 = vrot.lane.b32.xlu0 %v312, 28
        %v752 = vpop.permute.xlu0 %751
        %753 = vrot.lane.b32.xlu0 %v313, 28
        %v754 = vpop.permute.xlu0 %753
        %755 = vrot.lane.b32.xlu0 %v314, 28
        %v756 = vpop.permute.xlu0 %755
        %757 = vrot.lane.b32.xlu0 %v315, 28
        %v758 = vpop.permute.xlu0 %757
        %759 = vrot.lane.b32.xlu0 %v316, 28
        %v760 = vpop.permute.xlu0 %759
        %761 = vrot.lane.b32.xlu0 %v317, 28
        %v762 = vpop.permute.xlu0 %761
        %763 = vrot.lane.b32.xlu0 %v318, 28
        %v764 = vpop.permute.xlu0 %763
        %765 = vrot.lane.b32.xlu0 %v319, 28
        %v766 = vpop.permute.xlu0 %765
        %767 = vrot.lane.b32.xlu0 %v320, 28
        %v768 = vpop.permute.xlu0 %767
        %801 = vrot.lane.b32.xlu0 %v321, 32
        %v802 = vpop.permute.xlu0 %801
        %803 = vrot.lane.b32.xlu0 %v322, 32
        %v804 = vpop.permute.xlu0 %803
        %805 = vrot.lane.b32.xlu0 %v323, 32
        %v806 = vpop.permute.xlu0 %805
        %807 = vrot.lane.b32.xlu0 %v324, 32
        %v808 = vpop.permute.xlu0 %807
        %809 = vrot.lane.b32.xlu0 %v325, 32
        %v810 = vpop.permute.xlu0 %809
        %811 = vrot.lane.b32.xlu0 %v326, 32
        %v812 = vpop.permute.xlu0 %811
        %813 = vrot.lane.b32.xlu0 %v327, 32
        %v814 = vpop.permute.xlu0 %813
        %815 = vrot.lane.b32.xlu0 %v328, 32
        %v816 = vpop.permute.xlu0 %815
        %817 = vrot.lane.b32.xlu0 %v329, 32
        %v818 = vpop.permute.xlu0 %817
        %819 = vrot.lane.b32.xlu0 %v330, 32
        %v820 = vpop.permute.xlu0 %819
        %821 = vrot.lane.b32.xlu0 %v331, 32
        %v822 = vpop.permute.xlu0 %821
        %823 = vrot.lane.b32.xlu0 %v332, 32
        %v824 = vpop.permute.xlu0 %823
        %825 = vrot.lane.b32.xlu0 %v333, 32
        %v826 = vpop.permute.xlu0 %825
        %827 = vrot.lane.b32.xlu0 %v334, 32
        %v828 = vpop.permute.xlu0 %827
        %829 = vrot.lane.b32.xlu0 %v335, 32
        %v830 = vpop.permute.xlu0 %829
        %831 = vrot.lane.b32.xlu0 %v336, 32
        %v832 = vpop.permute.xlu0 %831
        %vm849 = vcmask 31744
        %v850 = vsel %vm849, %v187, %v354
        %v851 = vsel %vm849, %v188, %v356
        %v852 = vsel %vm849, %v189, %v358
        %v853 = vsel %vm849, %v190, %v360
        %v854 = vsel %vm849, %v191, %v362
        %v855 = vsel %vm849, %v192, %v364
        %v856 = vsel %vm849, %v193, %v366
        %v857 = vsel %vm849, %v194, %v368
        %v858 = vsel %vm849, %v195, %v370
        %v859 = vsel %vm849, %v196, %v372
        %v860 = vsel %vm849, %v197, %v374
        %v861 = vsel %vm849, %v198, %v376
        %v862 = vsel %vm849, %v199, %v378
        %v863 = vsel %vm849, %v200, %v380
        %v864 = vsel %vm849, %v201, %v382
        %v865 = vsel %vm849, %v202, %v384
        %vm866 = vcmask 64512
        %v867 = vsel %vm866, %v850, %v418
        %v868 = vsel %vm866, %v851, %v420
        %v869 = vsel %vm866, %v852, %v422
        %v870 = vsel %vm866, %v853, %v424
        %v871 = vsel %vm866, %v854, %v426
        %v872 = vsel %vm866, %v855, %v428
        %v873 = vsel %vm866, %v856, %v430
        %v874 = vsel %vm866, %v857, %v432
        %v875 = vsel %vm866, %v858, %v434
        %v876 = vsel %vm866, %v859, %v436
        %v877 = vsel %vm866, %v860, %v438
        %v878 = vsel %vm866, %v861, %v440
        %v879 = vsel %vm866, %v862, %v442
        %v880 = vsel %vm866, %v863, %v444
        %v881 = vsel %vm866, %v864, %v446
        %v882 = vsel %vm866, %v865, %v448
        %vm883 = vcmask 97280
        %v884 = vsel %vm883, %v867, %v482
        %v885 = vsel %vm883, %v868, %v484
        %v886 = vsel %vm883, %v869, %v486
        %v887 = vsel %vm883, %v870, %v488
        %v888 = vsel %vm883, %v871, %v490
        %v889 = vsel %vm883, %v872, %v492
        %v890 = vsel %vm883, %v873, %v494
        %v891 = vsel %vm883, %v874, %v496
        %v892 = vsel %vm883, %v875, %v498
        %v893 = vsel %vm883, %v876, %v500
        %v894 = vsel %vm883, %v877, %v502
        %v895 = vsel %vm883, %v878, %v504
        %v896 = vsel %vm883, %v879, %v506
        %v897 = vsel %vm883, %v880, %v508
        %v898 = vsel %vm883, %v881, %v510
        %v899 = vsel %vm883, %v882, %v512
        %vm900 = vcmask 130048
        %v901 = vsel %vm900, %v884, %v546
        %v902 = vsel %vm900, %v885, %v548
        %v903 = vsel %vm900, %v886, %v550
        %v904 = vsel %vm900, %v887, %v552
        %v905 = vsel %vm900, %v888, %v554
        %v906 = vsel %vm900, %v889, %v556
        %v907 = vsel %vm900, %v890, %v558
        %v908 = vsel %vm900, %v891, %v560
        %v909 = vsel %vm900, %v892, %v562
        %v910 = vsel %vm900, %v893, %v564
        %v911 = vsel %vm900, %v894, %v566
        %v912 = vsel %vm900, %v895, %v568
        %v913 = vsel %vm900, %v896, %v570
        %v914 = vsel %vm900, %v897, %v572
        %v915 = vsel %vm900, %v898, %v574
        %v916 = vsel %vm900, %v899, %v576
        %vm917 = vcmask 162816
        %v918 = vsel %vm917, %v901, %v610
        %v919 = vsel %vm917, %v902, %v612
        %v920 = vsel %vm917, %v903, %v614
        %v921 = vsel %vm917, %v904, %v616
        %v922 = vsel %vm917, %v905, %v618
        %v923 = vsel %vm917, %v906, %v620
        %v924 = vsel %vm917, %v907, %v622
        %v925 = vsel %vm917, %v908, %v624
        %v926 = vsel %vm917, %v909, %v626
        %v927 = vsel %vm917, %v910, %v628
        %v928 = vsel %vm917, %v911, %v630
        %v929 = vsel %vm917, %v912, %v632
        %v930 = vsel %vm917, %v913, %v634
        %v931 = vsel %vm917, %v914, %v636
        %v932 = vsel %vm917, %v915, %v638
        %v933 = vsel %vm917, %v916, %v640
        %vm934 = vcmask 195584
        %v935 = vsel %vm934, %v918, %v674
        %v936 = vsel %vm934, %v919, %v676
        %v937 = vsel %vm934, %v920, %v678
        %v938 = vsel %vm934, %v921, %v680
        %v939 = vsel %vm934, %v922, %v682
        %v940 = vsel %vm934, %v923, %v684
        %v941 = vsel %vm934, %v924, %v686
        %v942 = vsel %vm934, %v925, %v688
        %v943 = vsel %vm934, %v926, %v690
        %v944 = vsel %vm934, %v927, %v692
        %v945 = vsel %vm934, %v928, %v694
        %v946 = vsel %vm934, %v929, %v696
        %v947 = vsel %vm934, %v930, %v698
        %v948 = vsel %vm934, %v931, %v700
        %v949 = vsel %vm934, %v932, %v702
        %v950 = vsel %vm934, %v933, %v704
        %vm951 = vcmask 228352
        %v952 = vsel %vm951, %v935, %v738
        %v953 = vsel %vm951, %v936, %v740
        %v954 = vsel %vm951, %v937, %v742
        %v955 = vsel %vm951, %v938, %v744
        %v956 = vsel %vm951, %v939, %v746
        %v957 = vsel %vm951, %v940, %v748
        %v958 = vsel %vm951, %v941, %v750
        %v959 = vsel %vm951, %v942, %v752
        %v960 = vsel %vm951, %v943, %v754
        %v961 = vsel %vm951, %v944, %v756
        %v962 = vsel %vm951, %v945, %v758
        %v963 = vsel %vm951, %v946, %v760
        %v964 = vsel %vm951, %v947, %v762
        %v965 = vsel %vm951, %v948, %v764
        %v966 = vsel %vm951, %v949, %v766
        %v967 = vsel %vm951, %v950, %v768
        %vm968 = vcmask 261120
        %v969 = vsel %vm968, %v952, %v802
        %v970 = vsel %vm968, %v953, %v804
        %v971 = vsel %vm968, %v954, %v806
        %v972 = vsel %vm968, %v955, %v808
        %v973 = vsel %vm968, %v956, %v810
        %v974 = vsel %vm968, %v957, %v812
        %v975 = vsel %vm968, %v958, %v814
        %v976 = vsel %vm968, %v959, %v816
        %v977 = vsel %vm968, %v960, %v818
        %v978 = vsel %vm968, %v961, %v820
        %v979 = vsel %vm968, %v962, %v822
        %v980 = vsel %vm968, %v963, %v824
        %v981 = vsel %vm968, %v964, %v826
        %v982 = vsel %vm968, %v965, %v828
        %v983 = vsel %vm968, %v966, %v830
        %v984 = vsel %vm968, %v967, %v832
        %v985 = vld [vmem:[%s1] sm:$0xff]
        %v986 = vld [vmem:[%s1 + $0x8] sm:$0xff]
        %v987 = vld [vmem:[%s1 + $0x10] sm:$0xff]
        %v988 = vld [vmem:[%s1 + $0x18] sm:$0xff]
        %v989 = vld [vmem:[%s1 + $0x20] sm:$0xf]
        %v990 = vld [vmem:[%s2] sm:$0x1]
        %v992 = vlaneseq
        %v993 = vshrl.u32 %v992, 7
        %v994 = vsub.s32 0, %v993
        %v995 = vrot.slane %v990, %v994
        %vm997 = vcmask 293888
        %v999 = vsel %vm997, %v969, 0
        %v1002 = vsel %vm997, %v970, 0
        %v1005 = vsel %vm997, %v971, 0
        %v1008 = vsel %vm997, %v972, 0
        %v1011 = vsel %vm997, %v973, 0
        %v1014 = vsel %vm997, %v974, 0
        %v1017 = vsel %vm997, %v975, 0
        %v1020 = vsel %vm997, %v976, 0
        %v1023 = vsel %vm997, %v977, 0
        %v1026 = vsel %vm997, %v978, 0
        %v1029 = vsel %vm997, %v979, 0
        %v1032 = vsel %vm997, %v980, 0
        %v1035 = vsel %vm997, %v981, 0
        %v1038 = vsel %vm997, %v982, 0
        %v1041 = vsel %vm997, %v983, 0
        %v1044 = vsel %vm997, %v984, 0
        %vm1046 = vcmask 1043456
        %v1048 = vsel %vm1046, %v989, 0
        %1050 = vmatprep.subr.mxu0 0.0
        %1051 = vmatpush1.msra.mxu0 0.0
        %1052 = vmatprep.subr.mxu0 0.0
        %1053 = vmatpush1.msra.mxu0 0.0
        %1054 = vmatprep.subr.mxu0 0.0
        %1055 = vmatpush1.msra.mxu0 0.0
        %1056 = vmatprep.subr.mxu0 0.0
        %1057 = vmatpush1.msra.mxu0 0.0
        %1058 = vmatprep.subr.mxu0 0.0
        %1059 = vmatpush1.msra.mxu0 0.0
        %1060 = vmatprep.subr.mxu0 0.0
        %1061 = vmatpush1.msra.mxu0 0.0
        %1062 = vmatprep.subr.mxu0 0.0
        %1063 = vmatpush1.msra.mxu0 0.0
        %1064 = vmatprep.subr.mxu0 0.0
        %1065 = vmatpush1.msra.mxu0 0.0
        %1066 = vmatprep.subr.mxu0 0.0
        %1067 = vmatpush1.msra.mxu0 0.0
        %1068 = vmatprep.subr.mxu0 0.0
        %1069 = vmatpush1.msra.mxu0 0.0
        %1070 = vmatprep.subr.mxu0 0.0
        %1071 = vmatpush1.msra.mxu0 0.0
        %1072 = vmatprep.subr.mxu0 0.0
        %1073 = vmatpush1.msra.mxu0 %v1048
        %1074 = vmatprep.subr.mxu0 0.0
        %1075 = vmatpush1.msra.mxu0 %v988
        %1076 = vmatprep.subr.mxu0 0.0
        %1077 = vmatpush1.msra.mxu0 %v987
        %1078 = vmatprep.subr.mxu0 0.0
        %1079 = vmatpush1.msra.mxu0 %v986
        %1080 = vmatprep.subr.mxu0 0.0
        %1081 = vmatpush1.msra.mxu0 %v985
        %1082 = vmatprep.subr.mxu0 0.0
        %1083 = vmatpush2.msra.mxu0 0.0
        %1084 = vmatprep.subr.mxu0 0.0
        %1085 = vmatpush2.msra.mxu0 0.0
        %1086 = vmatprep.subr.mxu0 0.0
        %1087 = vmatpush2.msra.mxu0 0.0
        %1088 = vmatprep.subr.mxu0 0.0
        %1089 = vmatpush2.msra.mxu0 0.0
        %1090 = vmatprep.subr.mxu0 0.0
        %1091 = vmatpush2.msra.mxu0 0.0
        %1092 = vmatprep.subr.mxu0 0.0
        %1093 = vmatpush2.msra.mxu0 0.0
        %1094 = vmatprep.subr.mxu0 0.0
        %1095 = vmatpush2.msra.mxu0 0.0
        %1096 = vmatprep.subr.mxu0 0.0
        %1097 = vmatpush2.msra.mxu0 0.0
        %1098 = vmatprep.subr.mxu0 0.0
        %1099 = vmatpush2.msra.mxu0 0.0
        %1100 = vmatprep.subr.mxu0 0.0
        %1101 = vmatpush2.msra.mxu0 0.0
        %1102 = vmatprep.subr.mxu0 0.0
        %1103 = vmatpush2.msra.mxu0 0.0
        %1104 = vmatprep.subr.mxu0 0.0
        %1105 = vmatpush2.msra.mxu0 0.0
        %1106 = vmatprep.subr.mxu0 0.0
        %1107 = vmatpush2.msra.mxu0 0.0
        %1108 = vmatprep.subr.mxu0 0.0
        %1109 = vmatpush2.msra.mxu0 0.0
        %1110 = vmatprep.subr.mxu0 0.0
        %1111 = vmatpush2.msra.mxu0 0.0
        %1112 = vmatprep.subr.mxu0 0.0
        %1113 = vmatpush2.msra.mxu0 0.0
        %1114 = vmatprep.mubr.f32.mxu0 0.0
        %1115 = vmatmul.mubr.f32.gmra.mxu0 %v999
        %v1116 = vpop.f32.mrf.mxu0
        %v1117 = vadd.f32 %v995, %v1116
        %v1118 = vpop.f32.mrf.mxu0
        %1119 = vmatprep.mubr.f32.mxu0 0.0
        %1120 = vmatmul.mubr.f32.gmra.mxu0 %v1002
        %v1121 = vpop.f32.mrf.mxu0
        %v1122 = vadd.f32 %v995, %v1121
        %v1123 = vpop.f32.mrf.mxu0
        %1124 = vmatprep.mubr.f32.mxu0 0.0
        %1125 = vmatmul.mubr.f32.gmra.mxu0 %v1005
        %v1126 = vpop.f32.mrf.mxu0
        %v1127 = vadd.f32 %v995, %v1126
        %v1128 = vpop.f32.mrf.mxu0
        %1129 = vmatprep.mubr.f32.mxu0 0.0
        %1130 = vmatmul.mubr.f32.gmra.mxu0 %v1008
        %v1131 = vpop.f32.mrf.mxu0
        %v1132 = vadd.f32 %v995, %v1131
        %v1133 = vpop.f32.mrf.mxu0
        %1134 = vmatprep.mubr.f32.mxu0 0.0
        %1135 = vmatmul.mubr.f32.gmra.mxu0 %v1011
        %v1136 = vpop.f32.mrf.mxu0
        %v1137 = vadd.f32 %v995, %v1136
        %v1138 = vpop.f32.mrf.mxu0
        %1139 = vmatprep.mubr.f32.mxu0 0.0
        %1140 = vmatmul.mubr.f32.gmra.mxu0 %v1014
        %v1141 = vpop.f32.mrf.mxu0
        %v1142 = vadd.f32 %v995, %v1141
        %v1143 = vpop.f32.mrf.mxu0
        %1144 = vmatprep.mubr.f32.mxu0 0.0
        %1145 = vmatmul.mubr.f32.gmra.mxu0 %v1017
        %v1146 = vpop.f32.mrf.mxu0
        %v1147 = vadd.f32 %v995, %v1146
        %v1148 = vpop.f32.mrf.mxu0
        %1149 = vmatprep.mubr.f32.mxu0 0.0
        %1150 = vmatmul.mubr.f32.gmra.mxu0 %v1020
        %v1151 = vpop.f32.mrf.mxu0
        %v1152 = vadd.f32 %v995, %v1151
        %v1153 = vpop.f32.mrf.mxu0
        %1154 = vmatprep.mubr.f32.mxu0 0.0
        %1155 = vmatmul.mubr.f32.gmra.mxu0 %v1023
        %v1156 = vpop.f32.mrf.mxu0
        %v1157 = vadd.f32 %v995, %v1156
        %v1158 = vpop.f32.mrf.mxu0
        %1159 = vmatprep.mubr.f32.mxu0 0.0
        %1160 = vmatmul.mubr.f32.gmra.mxu0 %v1026
        %v1161 = vpop.f32.mrf.mxu0
        %v1162 = vadd.f32 %v995, %v1161
        %v1163 = vpop.f32.mrf.mxu0
        %1164 = vmatprep.mubr.f32.mxu0 0.0
        %1165 = vmatmul.mubr.f32.gmra.mxu0 %v1029
        %v1166 = vpop.f32.mrf.mxu0
        %v1167 = vadd.f32 %v995, %v1166
        %v1168 = vpop.f32.mrf.mxu0
        %1169 = vmatprep.mubr.f32.mxu0 0.0
        %1170 = vmatmul.mubr.f32.gmra.mxu0 %v1032
        %v1171 = vpop.f32.mrf.mxu0
        %v1172 = vadd.f32 %v995, %v1171
        %v1173 = vpop.f32.mrf.mxu0
        %1174 = vmatprep.mubr.f32.mxu0 0.0
        %1175 = vmatmul.mubr.f32.gmra.mxu0 %v1035
        %v1176 = vpop.f32.mrf.mxu0
        %v1177 = vadd.f32 %v995, %v1176
        %v1178 = vpop.f32.mrf.mxu0
        %1179 = vmatprep.mubr.f32.mxu0 0.0
        %1180 = vmatmul.mubr.f32.gmra.mxu0 %v1038
        %v1181 = vpop.f32.mrf.mxu0
        %v1182 = vadd.f32 %v995, %v1181
        %v1183 = vpop.f32.mrf.mxu0
        %1184 = vmatprep.mubr.f32.mxu0 0.0
        %1185 = vmatmul.mubr.f32.gmra.mxu0 %v1041
        %v1186 = vpop.f32.mrf.mxu0
        %v1187 = vadd.f32 %v995, %v1186
        %v1188 = vpop.f32.mrf.mxu0
        %1189 = vmatprep.mubr.f32.mxu0 0.0
        %1190 = vmatmul.mubr.f32.gmra.mxu0 %v1044
        %v1191 = vpop.f32.mrf.mxu0
        %v1192 = vadd.f32 %v995, %v1191
        %v1193 = vpop.f32.mrf.mxu0
        %1194 = vdwg.mxu0
        %v1195 = vxor.u32 %v1117, 2147483648
        %v1196 = vxor.u32 %v1122, 2147483648
        %v1197 = vxor.u32 %v1127, 2147483648
        %v1198 = vxor.u32 %v1132, 2147483648
        %v1199 = vxor.u32 %v1137, 2147483648
        %v1200 = vxor.u32 %v1142, 2147483648
        %v1201 = vxor.u32 %v1147, 2147483648
        %v1202 = vxor.u32 %v1152, 2147483648
        %v1203 = vxor.u32 %v1157, 2147483648
        %v1204 = vxor.u32 %v1162, 2147483648
        %v1205 = vxor.u32 %v1167, 2147483648
        %v1206 = vxor.u32 %v1172, 2147483648
        %v1207 = vxor.u32 %v1177, 2147483648
        %v1208 = vxor.u32 %v1182, 2147483648
        %v1209 = vxor.u32 %v1187, 2147483648
        %v1210 = vxor.u32 %v1192, 2147483648
        %v1211 = vmul.f32 %v1195, 1.442695
        %v1212 = vpow.pop %v1211
        %v1213 = vmul.f32 %v1196, 1.442695
        %v1214 = vpow.pop %v1213
        %v1215 = vmul.f32 %v1197, 1.442695
        %v1216 = vpow.pop %v1215
        %v1217 = vmul.f32 %v1198, 1.442695
        %v1218 = vpow.pop %v1217
        %v1219 = vmul.f32 %v1199, 1.442695
        %v1220 = vpow.pop %v1219
        %v1221 = vmul.f32 %v1200, 1.442695
        %v1222 = vpow.pop %v1221
        %v1223 = vmul.f32 %v1201, 1.442695
        %v1224 = vpow.pop %v1223
        %v1225 = vmul.f32 %v1202, 1.442695
        %v1226 = vpow.pop %v1225
        %v1227 = vmul.f32 %v1203, 1.442695
        %v1228 = vpow.pop %v1227
        %v1229 = vmul.f32 %v1204, 1.442695
        %v1230 = vpow.pop %v1229
        %v1231 = vmul.f32 %v1205, 1.442695
        %v1232 = vpow.pop %v1231
        %v1233 = vmul.f32 %v1206, 1.442695
        %v1234 = vpow.pop %v1233
        %v1235 = vmul.f32 %v1207, 1.442695
        %v1236 = vpow.pop %v1235
        %v1237 = vmul.f32 %v1208, 1.442695
        %v1238 = vpow.pop %v1237
        %v1239 = vmul.f32 %v1209, 1.442695
        %v1240 = vpow.pop %v1239
        %v1241 = vmul.f32 %v1210, 1.442695
        %v1242 = vpow.pop %v1241
        %v1243 = vadd.f32 %v1212, 1.0
        %v1244 = vadd.f32 %v1214, 1.0
        %v1245 = vadd.f32 %v1216, 1.0
        %v1246 = vadd.f32 %v1218, 1.0
        %v1247 = vadd.f32 %v1220, 1.0
        %v1248 = vadd.f32 %v1222, 1.0
        %v1249 = vadd.f32 %v1224, 1.0
        %v1250 = vadd.f32 %v1226, 1.0
        %v1251 = vadd.f32 %v1228, 1.0
        %v1252 = vadd.f32 %v1230, 1.0
        %v1253 = vadd.f32 %v1232, 1.0
        %v1254 = vadd.f32 %v1234, 1.0
        %v1255 = vadd.f32 %v1236, 1.0
        %v1256 = vadd.f32 %v1238, 1.0
        %v1257 = vadd.f32 %v1240, 1.0
        %v1258 = vadd.f32 %v1242, 1.0
        %v1259 = vrcp.pop %v1243
        %v1260 = vmul.f32 1.0, %v1259
        %v1261 = vrcp.pop %v1244
        %v1262 = vmul.f32 1.0, %v1261
        %v1263 = vrcp.pop %v1245
        %v1264 = vmul.f32 1.0, %v1263
        %v1265 = vrcp.pop %v1246
        %v1266 = vmul.f32 1.0, %v1265
        %v1267 = vrcp.pop %v1247
        %v1268 = vmul.f32 1.0, %v1267
        %v1269 = vrcp.pop %v1248
        %v1270 = vmul.f32 1.0, %v1269
        %v1271 = vrcp.pop %v1249
        %v1272 = vmul.f32 1.0, %v1271
        %v1273 = vrcp.pop %v1250
        %v1274 = vmul.f32 1.0, %v1273
        %v1275 = vrcp.pop %v1251
        %v1276 = vmul.f32 1.0, %v1275
        %v1277 = vrcp.pop %v1252
        %v1278 = vmul.f32 1.0, %v1277
        %v1279 = vrcp.pop %v1253
        %v1280 = vmul.f32 1.0, %v1279
        %v1281 = vrcp.pop %v1254
        %v1282 = vmul.f32 1.0, %v1281
        %v1283 = vrcp.pop %v1255
        %v1284 = vmul.f32 1.0, %v1283
        %v1285 = vrcp.pop %v1256
        %v1286 = vmul.f32 1.0, %v1285
        %v1287 = vrcp.pop %v1257
        %v1288 = vmul.f32 1.0, %v1287
        %v1289 = vrcp.pop %v1258
        %v1290 = vmul.f32 1.0, %v1289
        %v1291 = vmul.f32 %v1117, %v1260
        %v1292 = vmul.f32 %v1122, %v1262
        %v1293 = vmul.f32 %v1127, %v1264
        %v1294 = vmul.f32 %v1132, %v1266
        %v1295 = vmul.f32 %v1137, %v1268
        %v1296 = vmul.f32 %v1142, %v1270
        %v1297 = vmul.f32 %v1147, %v1272
        %v1298 = vmul.f32 %v1152, %v1274
        %v1299 = vmul.f32 %v1157, %v1276
        %v1300 = vmul.f32 %v1162, %v1278
        %v1301 = vmul.f32 %v1167, %v1280
        %v1302 = vmul.f32 %v1172, %v1282
        %v1303 = vmul.f32 %v1177, %v1284
        %v1304 = vmul.f32 %v1182, %v1286
        %v1305 = vmul.f32 %v1187, %v1288
        %v1306 = vmul.f32 %v1192, %v1290
        %1307 = vst [vmem:[%s177] sm:$0xff] %v1291
        %1308 = vst [vmem:[%s177 + $0x8] sm:$0xff] %v1292
        %1309 = vst [vmem:[%s177 + $0x10] sm:$0xff] %v1293
        %1310 = vst [vmem:[%s177 + $0x18] sm:$0xff] %v1294
        %1311 = vst [vmem:[%s177 + $0x20] sm:$0xff] %v1295
        %1312 = vst [vmem:[%s177 + $0x28] sm:$0xff] %v1296
        %1313 = vst [vmem:[%s177 + $0x30] sm:$0xff] %v1297
        %1314 = vst [vmem:[%s177 + $0x38] sm:$0xff] %v1298
        %1315 = vst [vmem:[%s177 + $0x40] sm:$0xff] %v1299
        %1316 = vst [vmem:[%s177 + $0x48] sm:$0xff] %v1300
        %1317 = vst [vmem:[%s177 + $0x50] sm:$0xff] %v1301
        %1318 = vst [vmem:[%s177 + $0x58] sm:$0xff] %v1302
        %1319 = vst [vmem:[%s177 + $0x60] sm:$0xff] %v1303
        %1320 = vst [vmem:[%s177 + $0x68] sm:$0xff] %v1304
        %1321 = vst [vmem:[%s177 + $0x70] sm:$0xff] %v1305
        %1322 = vst [vmem:[%s177 + $0x78] sm:$0xff] %v1306
        %s1323 = sand.u32 %s107, 1
        %s1324 = scalar_lea.sflag [#allocation3], %s1323
        %s1325 = sand.u32 %s107, 1
        %s1326 = smul.addr %s1325, 128
        %s1327 = scalar_lea.vmem [#allocation2], %s1326
        // Predicated region
        $region33: #{tpu_custom_call.1} parent=31 // pred_check
          %p1328 = pneg %p117
        $region34: #{tpu_custom_call.1} parent=31 // pred_check_branch
          %1330 = sbr.rel (%p1328) target = $region36
        $region35: #{tpu_custom_call.1} parent=31 // pred_region
          %s1331 = smul.u32 8, %s22
          %s1333 = ssub.s32 2048, 2048
          %1334 = vsyncadd %s1324, %s1333
          %s1335 = smul.addr %s1331, 2
          %s1336 = smul.addr %s21, 32
          %s1337 = sadd.s32 %s1335, %s1336
          %s1338 = smul.addr %s1337, 128
          %s1339 = scalar_lea.hbm %s3, %s1338
          %s1340 = sshll.u32 %s1327, 4
          %s1341 = int_to_ptr.vmem [resolvable:$true] %s1340
          %1346 = dma.vmem_to_hbm [thread:$0]  %s1341, 2048, %s1339, %s1324, 128, 128, 8
        $region36: #{tpu_custom_call.1} parent=31 // pred_fallthru
          _
      $region32: #{tpu_custom_call.1} parent=5 // pred_fallthru
        _
      %p1347 = scmp.le.s32.totalorder 2, %s12
      // Predicated region
      $region37: #{tpu_custom_call.1} parent=5 // pred_check
        %p1348 = pneg %p1347
      $region38: #{tpu_custom_call.1} parent=5 // pred_check_branch
        %1350 = sbr.rel (%p1348) target = $region40
      $region39: #{tpu_custom_call.1} parent=5 // pred_region
        %s1351 = ssub.s32 %s12, 2
        // Predicated region
        $region41: #{tpu_custom_call.1} parent=39 // pred_check
          %p1352 = pneg %p123
        $region42: #{tpu_custom_call.1} parent=39 // pred_check_branch
          %1354 = sbr.rel (%p1352) target = $region44
        $region43: #{tpu_custom_call.1} parent=39 // pred_region
          %s1355 = sand.u32 %s108, 1
          %s1356 = scalar_lea.sflag [#allocation3], %s1355
          %s1357 = sand.u32 %s108, 1
          %s1358 = smul.addr %s1357, 128
          %s1359 = scalar_lea.vmem [#allocation2], %s1358
          %1360 = dma.done %s1356, 2048
        $region44: #{tpu_custom_call.1} parent=39 // pred_fallthru
          _
      $region40: #{tpu_custom_call.1} parent=5 // pred_fallthru
        _
    $region6: #{tpu_custom_call.1} parent=1 // loop_footer
      %s16 = sadd.s32 1, %s12
    $region7: #{tpu_custom_call.1} parent=1 // loop_footer_branch
      %11 = sbr.rel target = $region3
    $region8: #{tpu_custom_call.1} parent=1 // loop_exit
      _
    %1361 = vsyncpa [#allocation3], 1
    %s1362 = scalar_lea.sflag [#allocation3], 1
    %1363 = vsyncpa %s1362, 1

</llo_original>
